<compile_context>
chip_gen: v5e
topology: v5e:2x2
jax: 0.10.0
libtpu: 0.0.40
codegen_flags: <defaults>
</compile_context>

<pallas_src>
import functools

import jax
import jax.numpy as jnp
from jax.experimental import pallas as pl
from jax.experimental.pallas import tpu as pltpu

_LANES = 128
_ACC_ROWS = 32          # accumulator sublane extent (4 vregs of ILP per accumulator)
_N_SPLIT = 2            # leading "parallel" grid axis (TensorCore split on v7x)
_MAX_TILE_ROWS = 8192   # ~4 MiB per f32 input block; 2x-buffered set ~18 MiB


def _silog_kernel(est_ref, gt_ref, mask_ref, out_ref,
                  sd_ref, sd2_ref, cnt_ref,
                  *, steps_per_split, tile_rows, total_rows, mask_tail):
    s = pl.program_id(1)

    @pl.when(s == 0)
    def _init():
        sd_ref[...] = jnp.zeros_like(sd_ref)
        sd2_ref[...] = jnp.zeros_like(sd2_ref)
        cnt_ref[...] = jnp.zeros_like(cnt_ref)

    valid = mask_ref[...]                              # (tile_rows, 128) bool
    if mask_tail:
        # The intended (unclamped) block may run past the true row extent
        # (ragged last block and/or fully out-of-range blocks of an uneven
        # core split); DMA'd contents there are undefined, so force invalid.
        blk = pl.program_id(0) * steps_per_split + s
        row = blk * tile_rows + jax.lax.broadcasted_iota(jnp.int32, valid.shape, 0)
        valid = jnp.logical_and(valid, row < total_rows)

    # Safe operands on invalid lanes so log never sees garbage / non-positive.
    est = jnp.where(valid, est_ref[...], 1.0)
    gt = jnp.where(valid, gt_ref[...], 1.0)
    d = jnp.log(est) - jnp.log(gt)                     # exactly 0.0 where invalid
    cnt = valid.astype(jnp.float32)

    # Pure VPU accumulation into (32,128) partial sums: 4 independent vreg
    # chains per accumulator; no cross-lane work until the JAX-side finalize.
    k = d.shape[0] // _ACC_ROWS
    d3 = d.reshape(k, _ACC_ROWS, _LANES)
    sd_ref[...] += jnp.sum(d3, axis=0)
    sd2_ref[...] += jnp.sum(d3 * d3, axis=0)
    cnt_ref[...] += jnp.sum(cnt.reshape(k, _ACC_ROWS, _LANES), axis=0)

    @pl.when(s == steps_per_split - 1)
    def _finalize():
        out_ref[0:_ACC_ROWS, :] = sd_ref[...]
        out_ref[_ACC_ROWS:2 * _ACC_ROWS, :] = sd2_ref[...]
        out_ref[2 * _ACC_ROWS:3 * _ACC_ROWS, :] = cnt_ref[...]


def _round_up(x, m):
    return ((x + m - 1) // m) * m


def silog_loss_pallas(depth_est, depth_gt, mask, variance_focus, *,
                      tile_rows=_MAX_TILE_ROWS):
    """depth_est/depth_gt: (B, 1, H, W) float; mask: (B, 1, H, W) bool."""
    est_f = depth_est.reshape(-1).astype(jnp.float32)
    gt_f = depth_gt.reshape(-1).astype(jnp.float32)
    mask_b = mask.reshape(-1)
    if mask_b.dtype != jnp.bool_:
        mask_b = mask_b != 0

    n = est_f.shape[0]
    n_main = (n // _LANES) * _LANES          # multiple-of-128 prefix for the kernel
    rows = n_main // _LANES

    sum_d = jnp.float32(0.0)
    sum_d2 = jnp.float32(0.0)
    cnt = jnp.float32(0.0)

    if rows > 0:
        est2 = est_f[:n_main].reshape(rows, _LANES)    # bitcast-reshapes, no copy
        gt2 = gt_f[:n_main].reshape(rows, _LANES)
        m2 = mask_b[:n_main].reshape(rows, _LANES)

        # Block rows: multiple of 32 (covers the bool (32,128) and f32 (8,128)
        # tilings), capped so the double-buffered working set stays ~18 MiB.
        tr = max(_ACC_ROWS,
                 min(_round_up(tile_rows, _ACC_ROWS), _round_up(rows, _ACC_ROWS)))
        tr = min(tr, _MAX_TILE_ROWS)
        n_blocks = pl.cdiv(rows, tr)
        n_split = min(_N_SPLIT, n_blocks)
        steps_per_split = pl.cdiv(n_blocks, n_split)
        mask_tail = (n_split * steps_per_split * tr) > rows
        need_clamp = (n_split * steps_per_split) > n_blocks

        def in_idx(c, s):
            b = c * steps_per_split + s
            if need_clamp:
                b = jnp.minimum(b, n_blocks - 1)   # keep DMA in range; kernel masks it
            return (b, 0)

        tile_spec = pl.BlockSpec((tr, _LANES), in_idx)

        partials = pl.pallas_call(
            functools.partial(_silog_kernel,
                              steps_per_split=steps_per_split,
                              tile_rows=tr,
                              total_rows=rows,
                              mask_tail=mask_tail),
            out_shape=jax.ShapeDtypeStruct((n_split, 3 * _ACC_ROWS, _LANES),
                                           jnp.float32),
            grid_spec=pltpu.PrefetchScalarGridSpec(
                num_scalar_prefetch=0,
                grid=(n_split, steps_per_split),
                in_specs=[tile_spec, tile_spec, tile_spec],
                out_specs=pl.BlockSpec((None, 3 * _ACC_ROWS, _LANES),
                                       lambda c, s: (c, 0, 0)),
                scratch_shapes=[
                    pltpu.VMEM((_ACC_ROWS, _LANES), jnp.float32),   # sum d
                    pltpu.VMEM((_ACC_ROWS, _LANES), jnp.float32),   # sum d^2
                    pltpu.VMEM((_ACC_ROWS, _LANES), jnp.float32),   # count
                ],
            ),
            compiler_params=pltpu.CompilerParams(
                dimension_semantics=("parallel", "arbitrary"),
                vmem_limit_bytes=32 * 1024 * 1024),
            cost_estimate=pl.CostEstimate(
                flops=10 * n_main,
                transcendentals=2 * n_main,
                bytes_accessed=9 * n_main),
        )(est2, gt2, m2)

        sum_d = jnp.sum(partials[:, 0:_ACC_ROWS, :])
        sum_d2 = jnp.sum(partials[:, _ACC_ROWS:2 * _ACC_ROWS, :])
        cnt = jnp.sum(partials[:, 2 * _ACC_ROWS:3 * _ACC_ROWS, :])

    if n_main < n:
        # <128-element ragged tail: fold in with plain JAX instead of padding
        # (and re-copying) all three full arrays in the wrapper.
        te, tg, tm = est_f[n_main:], gt_f[n_main:], mask_b[n_main:]
        td = jnp.where(tm, jnp.log(te) - jnp.log(tg), 0.0)
        sum_d = sum_d + jnp.sum(td)
        sum_d2 = sum_d2 + jnp.sum(td * td)
        cnt = cnt + jnp.sum(tm.astype(jnp.float32))

    mean_d = sum_d / cnt
    mean_d2 = sum_d2 / cnt
    # No clamp: matches torch (negative variance term / empty mask -> NaN).
    return jnp.sqrt(mean_d2 - variance_focus * mean_d * mean_d) * 10.0


def silog_loss_ref(depth_est, depth_gt, mask, variance_focus):
    """Pure-JAX reference (matches torch semantics on the masked subset)."""
    d = jnp.where(mask, jnp.log(depth_est) - jnp.log(depth_gt), 0.0)
    cnt = jnp.sum(mask.astype(jnp.float32))
    mean_d = jnp.sum(d) / cnt
    mean_d2 = jnp.sum(d * d) / cnt
    return jnp.sqrt(mean_d2 - variance_focus * mean_d ** 2) * 10.0


def _check(key, shape, variance_focus, **kw):
    k1, k2, k3 = jax.random.split(key, 3)
    depth_est = jax.random.uniform(k1, shape, jnp.float32, 0.5, 10.0)
    depth_gt = jax.random.uniform(k2, shape, jnp.float32, 0.5, 10.0)
    mask = jax.random.uniform(k3, shape, jnp.float32) > 0.3
    loss = silog_loss_pallas(depth_est, depth_gt, mask, variance_focus, **kw)
    jax.block_until_ready(loss)
    ref = silog_loss_ref(depth_est, depth_gt, mask, variance_focus)
    assert jnp.allclose(loss, ref, rtol=1e-5, atol=1e-5), (shape, loss, ref)


if __name__ == "__main__":
    key = jax.random.PRNGKey(0)
    variance_focus = 0.85

    # Main case (NCHW depth maps), single block, default tile size.
    _check(key, (2, 1, 16, 16), variance_focus)
    # Multi-step accumulation along the "arbitrary" axis + 2-way core split.
    _check(jax.random.fold_in(key, 1), (4, 1, 64, 64), variance_focus, tile_rows=32)
    # Odd block count: exercises the clamped out-of-range block + ragged last block.
    _check(jax.random.fold_in(key, 2), (1, 1, 96, 96), variance_focus, tile_rows=32)
    # Non-128-divisible element count: exercises the plain-JAX ragged tail path.
    _check(jax.random.fold_in(key, 3), (1, 1, 13, 19), variance_focus, tile_rows=32)

    print("KERNEL_OK")
</pallas_src>

<mosaic_0001>
module attributes {stable_mosaic.version = 11 : i64} {
  func.func @_silog_kernel(%arg0: i32, %arg1: i32, %arg2: memref<32x128xf32, #tpu.memory_space<vmem>>, %arg3: memref<32x128xf32, #tpu.memory_space<vmem>>, %arg4: memref<32x128xi32, #tpu.memory_space<vmem>>, %arg5: memref<1x96x128xf32, #tpu.memory_space<vmem>>, %arg6: memref<32x128xf32, #tpu.memory_space<vmem>>, %arg7: memref<32x128xf32, #tpu.memory_space<vmem>>, %arg8: memref<32x128xf32, #tpu.memory_space<vmem>>) attributes {dimension_semantics = [#tpu.dimension_semantics<parallel>, #tpu.dimension_semantics<arbitrary>], iteration_bounds = array<i64: 1, 1>, scalar_prefetch = 0 : i64, scratch_operands = 3 : i64, tpu.core_type = #tpu.core_type<tc>, window_params = [{transform_indices = @transform_0, window_bounds = array<i64: 32, 128>}, {transform_indices = @transform_1, window_bounds = array<i64: 32, 128>}, {transform_indices = @transform_2, window_bounds = array<i64: 32, 128>}, {transform_indices = @transform_3, window_bounds = array<i64: 1, 96, 128>}]} {
    %c0_i32 = arith.constant 0 : i32
    %0 = arith.cmpi eq, %arg1, %c0_i32 : i32
    %1 = arith.extui %0 : i1 to i32
    %c0_i32_0 = arith.constant 0 : i32
    %2 = arith.cmpi ne, %1, %c0_i32_0 : i32
    scf.if %2 {
      %cst_25 = arith.constant 0.000000e+00 : f32
      %43 = vector.broadcast %cst_25 : f32 to vector<32x128xf32>
      %c0_26 = arith.constant 0 : index
      %c0_27 = arith.constant 0 : index
      %44 = vector.load %arg6[%c0_26, %c0_27] : memref<32x128xf32, #tpu.memory_space<vmem>>, vector<32x128xf32>
      tpu.vector_store %arg6[%c0_26, %c0_27], %43 {strides = array<i32>} : memref<32x128xf32, #tpu.memory_space<vmem>>, vector<32x128xf32>,
      %cst_28 = arith.constant 0.000000e+00 : f32
      %45 = vector.broadcast %cst_28 : f32 to vector<32x128xf32>
      %c0_29 = arith.constant 0 : index
      %c0_30 = arith.constant 0 : index
      %46 = vector.load %arg7[%c0_29, %c0_30] : memref<32x128xf32, #tpu.memory_space<vmem>>, vector<32x128xf32>
      tpu.vector_store %arg7[%c0_29, %c0_30], %45 {strides = array<i32>} : memref<32x128xf32, #tpu.memory_space<vmem>>, vector<32x128xf32>,
      %cst_31 = arith.constant 0.000000e+00 : f32
      %47 = vector.broadcast %cst_31 : f32 to vector<32x128xf32>
      %c0_32 = arith.constant 0 : index
      %c0_33 = arith.constant 0 : index
      %48 = vector.load %arg8[%c0_32, %c0_33] : memref<32x128xf32, #tpu.memory_space<vmem>>, vector<32x128xf32>
      tpu.vector_store %arg8[%c0_32, %c0_33], %47 {strides = array<i32>} : memref<32x128xf32, #tpu.memory_space<vmem>>, vector<32x128xf32>,
    } else {
    }
    %c0 = arith.constant 0 : index
    %c0_1 = arith.constant 0 : index
    %3 = vector.load %arg4[%c0, %c0_1] : memref<32x128xi32, #tpu.memory_space<vmem>>, vector<32x128xi32>
    %cst = arith.constant dense<0> : vector<32x128xi32>
    %4 = arith.cmpi ne, %3, %cst : vector<32x128xi32>
    %c1_i32 = arith.constant 1 : i32
    %5 = arith.muli %arg0, %c1_i32 : i32
    %6 = arith.addi %5, %arg1 : i32
    %c32_i32 = arith.constant 32 : i32
    %7 = arith.muli %6, %c32_i32 : i32
    %8 = tpu.iota {dimensions = array<i32: 0>} : vector<32x128xi32>
    %9 = vector.broadcast %7 : i32 to vector<32x128xi32>
    %10 = arith.addi %9, %8 : vector<32x128xi32>
    %c4_i32 = arith.constant 4 : i32
    %11 = vector.broadcast %c4_i32 : i32 to vector<32x128xi32>
    %12 = arith.cmpi slt, %10, %11 : vector<32x128xi32>
    %13 = arith.andi %4, %12 : vector<32x128xi1>
    %c0_2 = arith.constant 0 : index
    %c0_3 = arith.constant 0 : index
    %14 = vector.load %arg2[%c0_2, %c0_3] : memref<32x128xf32, #tpu.memory_space<vmem>>, vector<32x128xf32>
    %cst_4 = arith.constant 1.000000e+00 : f32
    %15 = vector.broadcast %cst_4 : f32 to vector<32x128xf32>
    %16 = arith.select %13, %14, %15 : vector<32x128xi1>, vector<32x128xf32>
    %c0_5 = arith.constant 0 : index
    %c0_6 = arith.constant 0 : index
    %17 = vector.load %arg3[%c0_5, %c0_6] : memref<32x128xf32, #tpu.memory_space<vmem>>, vector<32x128xf32>
    %cst_7 = arith.constant 1.000000e+00 : f32
    %18 = vector.broadcast %cst_7 : f32 to vector<32x128xf32>
    %19 = arith.select %13, %17, %18 : vector<32x128xi1>, vector<32x128xf32>
    %20 = math.log %16 : vector<32x128xf32>
    %21 = math.log %19 : vector<32x128xf32>
    %22 = arith.subf %20, %21 : vector<32x128xf32>
    %23 = arith.extui %13 : vector<32x128xi1> to vector<32x128xi32>
    %24 = arith.sitofp %23 : vector<32x128xi32> to vector<32x128xf32>
    %25 = vector.shape_cast %22 : vector<32x128xf32> to vector<1x32x128xf32>
    %c0_8 = arith.constant 0 : index
    %c0_9 = arith.constant 0 : index
    %26 = vector.load %arg6[%c0_8, %c0_9] : memref<32x128xf32, #tpu.memory_space<vmem>>, vector<32x128xf32>
    %cst_10 = arith.constant dense<0.000000e+00> : vector<32x128xf32>
    %27 = vector.multi_reduction <add>, %25, %cst_10 [0] : vector<1x32x128xf32> to vector<32x128xf32>
    %28 = arith.addf %26, %27 : vector<32x128xf32>
    %c0_11 = arith.constant 0 : index
    %c0_12 = arith.constant 0 : index
    %29 = vector.load %arg6[%c0_11, %c0_12] : memref<32x128xf32, #tpu.memory_space<vmem>>, vector<32x128xf32>
    tpu.vector_store %arg6[%c0_11, %c0_12], %28 {strides = array<i32>} : memref<32x128xf32, #tpu.memory_space<vmem>>, vector<32x128xf32>,
    %c0_13 = arith.constant 0 : index
    %c0_14 = arith.constant 0 : index
    %30 = vector.load %arg7[%c0_13, %c0_14] : memref<32x128xf32, #tpu.memory_space<vmem>>, vector<32x128xf32>
    %31 = arith.mulf %25, %25 : vector<1x32x128xf32>
    %cst_15 = arith.constant dense<0.000000e+00> : vector<32x128xf32>
    %32 = vector.multi_reduction <add>, %31, %cst_15 [0] : vector<1x32x128xf32> to vector<32x128xf32>
    %33 = arith.addf %30, %32 : vector<32x128xf32>
    %c0_16 = arith.constant 0 : index
    %c0_17 = arith.constant 0 : index
    %34 = vector.load %arg7[%c0_16, %c0_17] : memref<32x128xf32, #tpu.memory_space<vmem>>, vector<32x128xf32>
    tpu.vector_store %arg7[%c0_16, %c0_17], %33 {strides = array<i32>} : memref<32x128xf32, #tpu.memory_space<vmem>>, vector<32x128xf32>,
    %c0_18 = arith.constant 0 : index
    %c0_19 = arith.constant 0 : index
    %35 = vector.load %arg8[%c0_18, %c0_19] : memref<32x128xf32, #tpu.memory_space<vmem>>, vector<32x128xf32>
    %36 = vector.shape_cast %24 : vector<32x128xf32> to vector<1x32x128xf32>
    %cst_20 = arith.constant dense<0.000000e+00> : vector<32x128xf32>
    %37 = vector.multi_reduction <add>, %36, %cst_20 [0] : vector<1x32x128xf32> to vector<32x128xf32>
    %38 = arith.addf %35, %37 : vector<32x128xf32>
    %c0_21 = arith.constant 0 : index
    %c0_22 = arith.constant 0 : index
    %39 = vector.load %arg8[%c0_21, %c0_22] : memref<32x128xf32, #tpu.memory_space<vmem>>, vector<32x128xf32>
    tpu.vector_store %arg8[%c0_21, %c0_22], %38 {strides = array<i32>} : memref<32x128xf32, #tpu.memory_space<vmem>>, vector<32x128xf32>,
    %c0_i32_23 = arith.constant 0 : i32
    %40 = arith.cmpi eq, %arg1, %c0_i32_23 : i32
    %41 = arith.extui %40 : i1 to i32
    %c0_i32_24 = arith.constant 0 : i32
    %42 = arith.cmpi ne, %41, %c0_i32_24 : i32
    scf.if %42 {
      %c0_25 = arith.constant 0 : index
      %c0_26 = arith.constant 0 : index
      %43 = vector.load %arg6[%c0_25, %c0_26] : memref<32x128xf32, #tpu.memory_space<vmem>>, vector<32x128xf32>
      %c0_27 = arith.constant 0 : index
      %c0_28 = arith.constant 0 : index
      %c0_29 = arith.constant 0 : index
      %44 = vector.load %arg5[%c0_27, %c0_28, %c0_29] : memref<1x96x128xf32, #tpu.memory_space<vmem>>, vector<1x32x128xf32>
      %45 = vector.shape_cast %44 : vector<1x32x128xf32> to vector<32x128xf32>
      %46 = vector.shape_cast %43 : vector<32x128xf32> to vector<1x32x128xf32>
      tpu.vector_store %arg5[%c0_27, %c0_28, %c0_29], %46 {strides = array<i32>} : memref<1x96x128xf32, #tpu.memory_space<vmem>>, vector<1x32x128xf32>,
      %c0_30 = arith.constant 0 : index
      %c0_31 = arith.constant 0 : index
      %47 = vector.load %arg7[%c0_30, %c0_31] : memref<32x128xf32, #tpu.memory_space<vmem>>, vector<32x128xf32>
      %c0_32 = arith.constant 0 : index
      %c32 = arith.constant 32 : index
      %c0_33 = arith.constant 0 : index
      %48 = vector.load %arg5[%c0_32, %c32, %c0_33] : memref<1x96x128xf32, #tpu.memory_space<vmem>>, vector<1x32x128xf32>
      %49 = vector.shape_cast %48 : vector<1x32x128xf32> to vector<32x128xf32>
      %50 = vector.shape_cast %47 : vector<32x128xf32> to vector<1x32x128xf32>
      tpu.vector_store %arg5[%c0_32, %c32, %c0_33], %50 {strides = array<i32>} : memref<1x96x128xf32, #tpu.memory_space<vmem>>, vector<1x32x128xf32>,
      %c0_34 = arith.constant 0 : index
      %c0_35 = arith.constant 0 : index
      %51 = vector.load %arg8[%c0_34, %c0_35] : memref<32x128xf32, #tpu.memory_space<vmem>>, vector<32x128xf32>
      %c0_36 = arith.constant 0 : index
      %c64 = arith.constant 64 : index
      %c0_37 = arith.constant 0 : index
      %52 = vector.load %arg5[%c0_36, %c64, %c0_37] : memref<1x96x128xf32, #tpu.memory_space<vmem>>, vector<1x32x128xf32>
      %53 = vector.shape_cast %52 : vector<1x32x128xf32> to vector<32x128xf32>
      %54 = vector.shape_cast %51 : vector<32x128xf32> to vector<1x32x128xf32>
      tpu.vector_store %arg5[%c0_36, %c64, %c0_37], %54 {strides = array<i32>} : memref<1x96x128xf32, #tpu.memory_space<vmem>>, vector<1x32x128xf32>,
    } else {
    }
    return
  }
  func.func @transform_0(%arg0: i32, %arg1: i32) -> (i32, i32) {
    %c1_i32 = arith.constant 1 : i32
    %0 = arith.muli %arg0, %c1_i32 : i32
    %1 = arith.addi %0, %arg1 : i32
    %c0_i32 = arith.constant 0 : i32
    %c0_i32_0 = arith.constant 0 : i32
    return %1, %c0_i32 : i32, i32
  }
  func.func @transform_1(%arg0: i32, %arg1: i32) -> (i32, i32) {
    %c1_i32 = arith.constant 1 : i32
    %0 = arith.muli %arg0, %c1_i32 : i32
    %1 = arith.addi %0, %arg1 : i32
    %c0_i32 = arith.constant 0 : i32
    %c0_i32_0 = arith.constant 0 : i32
    return %1, %c0_i32 : i32, i32
  }
  func.func @transform_2(%arg0: i32, %arg1: i32) -> (i32, i32) {
    %c1_i32 = arith.constant 1 : i32
    %0 = arith.muli %arg0, %c1_i32 : i32
    %1 = arith.addi %0, %arg1 : i32
    %c0_i32 = arith.constant 0 : i32
    %c0_i32_0 = arith.constant 0 : i32
    return %1, %c0_i32 : i32, i32
  }
  func.func @transform_3(%arg0: i32, %arg1: i32) -> (i32, i32, i32) {
    %c0_i32 = arith.constant 0 : i32
    %c0_i32_0 = arith.constant 0 : i32
    %c0_i32_1 = arith.constant 0 : i32
    return %arg0, %c0_i32, %c0_i32_0 : i32, i32, i32
  }
}

</mosaic_0001>

<llo_original>
// kernel: tpu_custom_call.1
$region0: #{tpu_custom_call.1}
  #allocation0 [shape = 'u32[]', space=smem, size = 0x4, offset = 0x4, fixed_abs, tag = 'smem constant byte address 0x4 - core index']
  #allocation1 [shape = 'u32[72,128]{1,0:T(1,128)}', space=vmem, size = 0x9000, scoped, tag = 'internal scratch']
  #allocation2 [shape = 'f32[32,128]{1,0:T(8,128)}', space=vmem, size = 0x4000, scoped, tag = 'scratch operand']
  #allocation3 [shape = 'f32[32,128]{1,0:T(8,128)}', space=vmem, size = 0x4000, scoped, tag = 'scratch operand']
  #allocation4 [shape = 'f32[32,128]{1,0:T(8,128)}', space=vmem, size = 0x4000, scoped, tag = 'scratch operand']
  %s0 = inlined_call_operand.vmem [shape: f32[4,128], index: 0, kind: input, shape index: {}]
  %s1 = inlined_call_operand.hbm [shape: f32[4,128], index: 1, kind: input, shape index: {}]
  %s2 = inlined_call_operand.vmem [shape: s32[4,128], index: 2, kind: input, shape index: {}]
  %s3 = inlined_call_operand.hbm [shape: f32[1,96,128], index: 3, kind: output, shape index: {}]
  %s4 = sld [smem:[#allocation0]]
  $region34: #{tpu_custom_call.1} parent=0
    _
  %s6 = ssub.s32 1, %s4
  %s7 = scalar_select 0, %s6, %s4
  $region1: #{tpu_custom_call.1} parent=0
    #allocation5 [shape = 'u8[16384]{0}', space=vmem, size = 0x4000, scoped, tag = 'input window, operand 1, single buffered']
    #allocation6 [shape = 's32[1]{0}', space=sflag, size = 0x4, scoped, tag = 'scoped memory for tpu_custom_call.1']
    #allocation7 [shape = 's32[1]{0}', space=sflag, size = 0x4, scoped, tag = 'scoped memory for tpu_custom_call.1']
    #allocation8 [shape = 'u8[49152]{0}', space=vmem, size = 0xc000, scoped, tag = 'output window, operand 0, single buffered']
    %8 = vsyncpa [#allocation6], 0
    %9 = vsyncpa [#allocation7], 0
    // Predicated region
    $region2: #{tpu_custom_call.1} parent=1 // pred_check
      _
    $region3: #{tpu_custom_call.1} parent=1 // pred_check_branch
      %11 = sbr.rel (0) target = $region5
    $region4: #{tpu_custom_call.1} parent=1 // pred_region
      %s12 = sadd.s32 0, 0
      %s13 = smul.u32 8, %s12
      %s14 = ssub.s32 1, %s13
      %s15 = smul.u32 4, %s14
      %p16 = scmp.lt.s32.totalorder %s13, 0
      %s17 = scalar_select %p16, %s13, 0
      %s18 = smul.addr %s17, 4
      %s19 = scalar_lea.vmem %s0, %s18
      %s20 = sadd.s32 0, 0
      %s21 = smul.u32 8, %s20
      %s22 = ssub.s32 1, %s21
      %s23 = smul.u32 4, %s22
    $region5: #{tpu_custom_call.1} parent=1 // pred_fallthru
      _
    // Predicated region
    $region6: #{tpu_custom_call.1} parent=1 // pred_check
      _
    $region7: #{tpu_custom_call.1} parent=1 // pred_check_branch
      %25 = sbr.rel (0) target = $region9
    $region8: #{tpu_custom_call.1} parent=1 // pred_region
      %s26 = sadd.s32 0, 0
      %s27 = smul.u32 8, %s26
      %s28 = ssub.s32 1, %s27
      %s29 = smul.u32 4, %s28
      %s30 = ssub.s32 32, %s29
      %s31 = sshll.u32 %s30, 4
      %32 = vsyncadd [#allocation6], %s31
      %p33 = scmp.ne.s32.totalorder 0, %s29
      %s34 = smul.addr %s27, 4
      %s35 = scalar_lea.hbm %s1, %s34
      %s36 = smul.u32 4, %s28
      %s37 = sshll.u32 %s35, 4
      %s38 = int_to_ptr.hbm [resolvable:$true] %s37
      %s39 = sshll.u32 [#allocation5], 4
      %s40 = int_to_ptr.vmem [resolvable:$true] %s39
      %s41 = sshll.u32 %s36, 4
      %45 = dma.hbm_to_vmem [thread:$0]  (%p33), %s38, %s41, %s40, [#allocation6], 64, 64, 4
    $region9: #{tpu_custom_call.1} parent=1 // pred_fallthru
      _
    // Predicated region
    $region10: #{tpu_custom_call.1} parent=1 // pred_check
      _
    $region11: #{tpu_custom_call.1} parent=1 // pred_check_branch
      %47 = sbr.rel (0) target = $region13
    $region12: #{tpu_custom_call.1} parent=1 // pred_region
      %s48 = sadd.s32 0, 0
      %s49 = smul.u32 8, %s48
      %s50 = ssub.s32 1, %s49
      %s51 = smul.u32 4, %s50
      %p52 = scmp.lt.s32.totalorder %s49, 0
      %s53 = scalar_select %p52, %s49, 0
      %s54 = smul.addr %s53, 4
      %s55 = scalar_lea.vmem %s2, %s54
      %s56 = sadd.s32 0, 0
      %s57 = smul.u32 8, %s56
      %s58 = ssub.s32 1, %s57
      %s59 = smul.u32 4, %s58
    $region13: #{tpu_custom_call.1} parent=1 // pred_fallthru
      _
    // Predicated region
    $region14: #{tpu_custom_call.1} parent=1 // pred_check
      _
    $region15: #{tpu_custom_call.1} parent=1 // pred_check_branch
      %61 = sbr.rel (0) target = $region17
    $region16: #{tpu_custom_call.1} parent=1 // pred_region
      %63 = dma.done [#allocation6], 512
    $region17: #{tpu_custom_call.1} parent=1 // pred_fallthru
      _
    %s64 = sadd.s32 0, 0
    %s65 = smul.u32 8, %s64
    %s66 = ssub.s32 1, %s65
    %s67 = smul.u32 4, %s66
    %p68 = scmp.lt.s32.totalorder %s65, 0
    %s69 = scalar_select %p68, %s65, 0
    %s70 = smul.addr %s69, 4
    %s71 = scalar_lea.vmem %s0, %s70
    %s72 = sadd.s32 0, 0
    %s73 = smul.u32 8, %s72
    %s74 = ssub.s32 1, %s73
    %s75 = smul.u32 4, %s74
    %p76 = scmp.lt.s32.totalorder %s73, 0
    %s77 = scalar_select %p76, %s73, 0
    %s78 = smul.addr %s77, 4
    %s79 = scalar_lea.vmem %s2, %s78
    %s80 = sadd.s32 0, 0
    %s81 = smul.u32 8, %s80
    %s82 = ssub.s32 1, %s81
    %s83 = smul.u32 4, %s82
    %p84 = scmp.lt.s32.totalorder %s81, 0
    %s85 = scalar_select %p84, %s81, 0
    %s86 = smul.addr %s85, 4
    %s87 = scalar_lea.vmem %s0, %s86
    %s88 = sadd.s32 0, 0
    %s89 = smul.u32 8, %s88
    %s90 = ssub.s32 1, %s89
    %s91 = smul.u32 4, %s90
    %s92 = sadd.s32 0, 0
    %s93 = smul.u32 8, %s92
    %s94 = ssub.s32 1, %s93
    %s95 = smul.u32 4, %s94
    %s96 = sadd.s32 0, 0
    %s97 = smul.u32 8, %s96
    %s98 = ssub.s32 1, %s97
    %s99 = smul.u32 4, %s98
    %p100 = scmp.lt.s32.totalorder %s97, 0
    %s101 = scalar_select %p100, %s97, 0
    %s102 = smul.addr %s101, 4
    %s103 = scalar_lea.vmem %s2, %s102
    %s104 = sadd.s32 0, 0
    %s105 = smul.u32 8, %s104
    %s106 = ssub.s32 1, %s105
    %s107 = smul.u32 4, %s106
    %p108 = scmp.eq.s32.totalorder 0, 0
    // Predicated region
    $region18: #{tpu_custom_call.1} parent=1 // pred_check
      %p109 = pneg %p108
    $region19: #{tpu_custom_call.1} parent=1 // pred_check_branch
      %111 = sbr.rel (%p109) target = $region21
    $region20: #{tpu_custom_call.1} parent=1 // pred_region
      %112 = vst [vmem:[#allocation2] sm:$0xff] 0.0
      %113 = vst [vmem:[#allocation2 + $0x8] sm:$0xff] 0.0
      %114 = vst [vmem:[#allocation2 + $0x10] sm:$0xff] 0.0
      %115 = vst [vmem:[#allocation2 + $0x18] sm:$0xff] 0.0
      %116 = vst [vmem:[#allocation3] sm:$0xff] 0.0
      %117 = vst [vmem:[#allocation3 + $0x8] sm:$0xff] 0.0
      %118 = vst [vmem:[#allocation3 + $0x10] sm:$0xff] 0.0
      %119 = vst [vmem:[#allocation3 + $0x18] sm:$0xff] 0.0
      %120 = vst [vmem:[#allocation4] sm:$0xff] 0.0
      %121 = vst [vmem:[#allocation4 + $0x8] sm:$0xff] 0.0
      %122 = vst [vmem:[#allocation4 + $0x10] sm:$0xff] 0.0
      %123 = vst [vmem:[#allocation4 + $0x18] sm:$0xff] 0.0
    $region21: #{tpu_custom_call.1} parent=1 // pred_fallthru
      _
    %v124 = vld [vmem:[%s103] sm:$0xff]
    %v125 = vld [vmem:[%s103 + $0x8] sm:$0xff]
    %v126 = vld [vmem:[%s103 + $0x10] sm:$0xff]
    %v127 = vld [vmem:[%s103 + $0x18] sm:$0xff]
    %vm128 = vcmp.ne.s32.totalorder %v124, 0
    %vm129 = vcmp.ne.s32.totalorder %v125, 0
    %vm130 = vcmp.ne.s32.totalorder %v126, 0
    %vm131 = vcmp.ne.s32.totalorder %v127, 0
    %s132 = sadd.s32 0, 0
    %s133 = smul.u32 %s132, 32
    %v134 = vlaneseq
    %v135 = vshrl.u32 %v134, 7
    %v136 = vadd.s32 %v135, 8
    %v137 = vadd.s32 %v135, 16
    %v138 = vadd.s32 %v135, 24
    %v139 = vstv %s133
    %v140 = vadd.s32 %v139, %v135
    %v141 = vadd.s32 %v139, %v136
    %v142 = vadd.s32 %v139, %v137
    %v143 = vadd.s32 %v139, %v138
    %vm144 = vcmp.lt.s32.totalorder %v140, 4
    %vm145 = vcmp.lt.s32.totalorder %v141, 4
    %vm146 = vcmp.lt.s32.totalorder %v142, 4
    %vm147 = vcmp.lt.s32.totalorder %v143, 4
    %vm148 = vmand %vm128, %vm144
    %vm149 = vmand %vm129, %vm145
    %vm150 = vmand %vm130, %vm146
    %vm151 = vmand %vm131, %vm147
    %v152 = vld [vmem:[%s87] sm:$0xff]
    %v153 = vld [vmem:[%s87 + $0x8] sm:$0xff]
    %v154 = vld [vmem:[%s87 + $0x10] sm:$0xff]
    %v155 = vld [vmem:[%s87 + $0x18] sm:$0xff]
    %v156 = vsel %vm148, %v152, 1.0
    %v157 = vsel %vm149, %v153, 1.0
    %v158 = vsel %vm150, %v154, 1.0
    %v159 = vsel %vm151, %v155, 1.0
    %v160 = vld [vmem:[#allocation5] sm:$0xff]
    %v161 = vld [vmem:[#allocation5 + $0x8] sm:$0xff]
    %v162 = vld [vmem:[#allocation5 + $0x10] sm:$0xff]
    %v163 = vld [vmem:[#allocation5 + $0x18] sm:$0xff]
    %v164 = vsel %vm148, %v160, 1.0
    %v165 = vsel %vm149, %v161, 1.0
    %v166 = vsel %vm150, %v162, 1.0
    %v167 = vsel %vm151, %v163, 1.0
    %v168 = vlog2.pop %v156
    %v169 = vmul.f32 %v168, 0.6931472
    %v170 = vlog2.pop %v157
    %v171 = vmul.f32 %v170, 0.6931472
    %v172 = vlog2.pop %v158
    %v173 = vmul.f32 %v172, 0.6931472
    %v174 = vlog2.pop %v159
    %v175 = vmul.f32 %v174, 0.6931472
    %v176 = vlog2.pop %v164
    %v177 = vmul.f32 %v176, 0.6931472
    %v178 = vlog2.pop %v165
    %v179 = vmul.f32 %v178, 0.6931472
    %v180 = vlog2.pop %v166
    %v181 = vmul.f32 %v180, 0.6931472
    %v182 = vlog2.pop %v167
    %v183 = vmul.f32 %v182, 0.6931472
    %v184 = vsub.f32 %v169, %v177
    %v185 = vsub.f32 %v171, %v179
    %v186 = vsub.f32 %v173, %v181
    %v187 = vsub.f32 %v175, %v183
    %v188 = vsel %vm148, 1, 0
    %v189 = vsel %vm149, 1, 0
    %v190 = vsel %vm150, 1, 0
    %v191 = vsel %vm151, 1, 0
    %v192 = vcvt.s32.f32 %v188
    %v193 = vcvt.s32.f32 %v189
    %v194 = vcvt.s32.f32 %v190
    %v195 = vcvt.s32.f32 %v191
    %v196 = vld [vmem:[#allocation2] sm:$0xff]
    %v197 = vld [vmem:[#allocation2 + $0x8] sm:$0xff]
    %v198 = vld [vmem:[#allocation2 + $0x10] sm:$0xff]
    %v199 = vld [vmem:[#allocation2 + $0x18] sm:$0xff]
    %v200 = vadd.f32 %v184, 0.0
    %v201 = vadd.f32 %v185, 0.0
    %v202 = vadd.f32 %v186, 0.0
    %v203 = vadd.f32 %v187, 0.0
    %v204 = vadd.f32 %v196, %v200
    %v205 = vadd.f32 %v197, %v201
    %v206 = vadd.f32 %v198, %v202
    %v207 = vadd.f32 %v199, %v203
    %208 = vst [vmem:[#allocation2] sm:$0xff] %v204
    %209 = vst [vmem:[#allocation2 + $0x8] sm:$0xff] %v205
    %210 = vst [vmem:[#allocation2 + $0x10] sm:$0xff] %v206
    %211 = vst [vmem:[#allocation2 + $0x18] sm:$0xff] %v207
    %v212 = vld [vmem:[#allocation3] sm:$0xff]
    %v213 = vld [vmem:[#allocation3 + $0x8] sm:$0xff]
    %v214 = vld [vmem:[#allocation3 + $0x10] sm:$0xff]
    %v215 = vld [vmem:[#allocation3 + $0x18] sm:$0xff]
    %v216 = vmul.f32 %v184, %v184
    %v217 = vmul.f32 %v185, %v185
    %v218 = vmul.f32 %v186, %v186
    %v219 = vmul.f32 %v187, %v187
    %v220 = vadd.f32 %v216, 0.0
    %v221 = vadd.f32 %v217, 0.0
    %v222 = vadd.f32 %v218, 0.0
    %v223 = vadd.f32 %v219, 0.0
    %v224 = vadd.f32 %v212, %v220
    %v225 = vadd.f32 %v213, %v221
    %v226 = vadd.f32 %v214, %v222
    %v227 = vadd.f32 %v215, %v223
    %228 = vst [vmem:[#allocation3] sm:$0xff] %v224
    %229 = vst [vmem:[#allocation3 + $0x8] sm:$0xff] %v225
    %230 = vst [vmem:[#allocation3 + $0x10] sm:$0xff] %v226
    %231 = vst [vmem:[#allocation3 + $0x18] sm:$0xff] %v227
    %v232 = vld [vmem:[#allocation4] sm:$0xff]
    %v233 = vld [vmem:[#allocation4 + $0x8] sm:$0xff]
    %v234 = vld [vmem:[#allocation4 + $0x10] sm:$0xff]
    %v235 = vld [vmem:[#allocation4 + $0x18] sm:$0xff]
    %v236 = vadd.f32 %v192, 0.0
    %v237 = vadd.f32 %v193, 0.0
    %v238 = vadd.f32 %v194, 0.0
    %v239 = vadd.f32 %v195, 0.0
    %v240 = vadd.f32 %v232, %v236
    %v241 = vadd.f32 %v233, %v237
    %v242 = vadd.f32 %v234, %v238
    %v243 = vadd.f32 %v235, %v239
    %244 = vst [vmem:[#allocation4] sm:$0xff] %v240
    %245 = vst [vmem:[#allocation4 + $0x8] sm:$0xff] %v241
    %246 = vst [vmem:[#allocation4 + $0x10] sm:$0xff] %v242
    %247 = vst [vmem:[#allocation4 + $0x18] sm:$0xff] %v243
    // Predicated region
    $region22: #{tpu_custom_call.1} parent=1 // pred_check
      %p248 = pneg %p108
    $region23: #{tpu_custom_call.1} parent=1 // pred_check_branch
      %250 = sbr.rel (%p248) target = $region25
    $region24: #{tpu_custom_call.1} parent=1 // pred_region
      %v251 = vld [vmem:[#allocation2] sm:$0xff]
      %v252 = vld [vmem:[#allocation2 + $0x8] sm:$0xff]
      %v253 = vld [vmem:[#allocation2 + $0x10] sm:$0xff]
      %v254 = vld [vmem:[#allocation2 + $0x18] sm:$0xff]
      %255 = vst [vmem:[#allocation8] sm:$0xff] %v251
      %256 = vst [vmem:[#allocation8 + $0x8] sm:$0xff] %v252
      %257 = vst [vmem:[#allocation8 + $0x10] sm:$0xff] %v253
      %258 = vst [vmem:[#allocation8 + $0x18] sm:$0xff] %v254
      %v259 = vld [vmem:[#allocation3] sm:$0xff]
      %v260 = vld [vmem:[#allocation3 + $0x8] sm:$0xff]
      %v261 = vld [vmem:[#allocation3 + $0x10] sm:$0xff]
      %v262 = vld [vmem:[#allocation3 + $0x18] sm:$0xff]
      %263 = vst [vmem:[#allocation8 + $0x20] sm:$0xff] %v259
      %264 = vst [vmem:[#allocation8 + $0x28] sm:$0xff] %v260
      %265 = vst [vmem:[#allocation8 + $0x30] sm:$0xff] %v261
      %266 = vst [vmem:[#allocation8 + $0x38] sm:$0xff] %v262
      %v267 = vld [vmem:[#allocation4] sm:$0xff]
      %v268 = vld [vmem:[#allocation4 + $0x8] sm:$0xff]
      %v269 = vld [vmem:[#allocation4 + $0x10] sm:$0xff]
      %v270 = vld [vmem:[#allocation4 + $0x18] sm:$0xff]
      %271 = vst [vmem:[#allocation8 + $0x40] sm:$0xff] %v267
      %272 = vst [vmem:[#allocation8 + $0x48] sm:$0xff] %v268
      %273 = vst [vmem:[#allocation8 + $0x50] sm:$0xff] %v269
      %274 = vst [vmem:[#allocation8 + $0x58] sm:$0xff] %v270
    $region25: #{tpu_custom_call.1} parent=1 // pred_fallthru
      _
    // Predicated region
    $region26: #{tpu_custom_call.1} parent=1 // pred_check
      _
    $region27: #{tpu_custom_call.1} parent=1 // pred_check_branch
      %276 = sbr.rel (0) target = $region29
    $region28: #{tpu_custom_call.1} parent=1 // pred_region
      %278 = vsyncadd [#allocation7], 0
      %s279 = sshll.u32 [#allocation8], 4
      %s280 = int_to_ptr.vmem [resolvable:$true] %s279
      %s281 = sshll.u32 %s3, 4
      %s282 = int_to_ptr.hbm [resolvable:$true] %s281
      %287 = dma.vmem_to_hbm [thread:$0]  %s280, 1536, %s282, [#allocation7], 128, 128, 8
    $region29: #{tpu_custom_call.1} parent=1 // pred_fallthru
      _
    // Predicated region
    $region30: #{tpu_custom_call.1} parent=1 // pred_check
      _
    $region31: #{tpu_custom_call.1} parent=1 // pred_check_branch
      %289 = sbr.rel (0) target = $region33
    $region32: #{tpu_custom_call.1} parent=1 // pred_region
      %291 = dma.done [#allocation7], 1536
    $region33: #{tpu_custom_call.1} parent=1 // pred_fallthru
      _
    %292 = vsyncpa [#allocation6], 1
    %293 = vsyncpa [#allocation7], 1

</llo_original>
